<compile_context>
chip_gen: v7x
topology: tpu7x:2x2x1
jax: 0.10.0
libtpu: 0.0.40
codegen_flags: <defaults>
</compile_context>

<pallas_src>
import math

import jax
import jax.numpy as jnp
from jax.experimental import pallas as pl
from jax.experimental.pallas import tpu as pltpu


# ---------------------------------------------------------------------------
# Config (T5-like, small synthetic sizes)
# ---------------------------------------------------------------------------
D_MODEL = 32
D_KV = 8
N_HEADS = 4
INNER_DIM = N_HEADS * D_KV            # 32
SEQ = 8
BATCH = 2
NUM_BUCKETS = 32
MAX_DISTANCE = 128
IS_DECODER = False
HAS_RELATIVE_ATTENTION_BIAS = True


# ---------------------------------------------------------------------------
# Relative position bias (glue, plain JAX) — mirrors Attention.compute_bias
# ---------------------------------------------------------------------------
def _relative_position_bucket(relative_position, bidirectional=True,
                              num_buckets=32, max_distance=128):
    relative_buckets = jnp.zeros_like(relative_position)
    if bidirectional:
        num_buckets //= 2
        relative_buckets = relative_buckets + \
            (relative_position > 0).astype(jnp.int32) * num_buckets
        relative_position = jnp.abs(relative_position)
    else:
        relative_position = -jnp.minimum(relative_position,
                                         jnp.zeros_like(relative_position))
    max_exact = num_buckets // 2
    is_small = relative_position < max_exact
    # clamp to >=1 before the log so relative_position==0 never produces -inf
    # (value discarded by the jnp.where below; keeps the int32 cast well-defined).
    rel_pos_f = jnp.maximum(relative_position, 1).astype(jnp.float32)
    rel_if_large = max_exact + (
        jnp.log(rel_pos_f / max_exact)
        / math.log(max_distance / max_exact)
        * (num_buckets - max_exact)
    ).astype(jnp.int32)
    rel_if_large = jnp.minimum(rel_if_large,
                               jnp.full_like(rel_if_large, num_buckets - 1))
    relative_buckets = relative_buckets + jnp.where(
        is_small, relative_position, rel_if_large)
    return relative_buckets


def compute_bias(rel_attn_bias_table, query_length, key_length):
    """rel_attn_bias_table: [num_buckets, n_heads] -> bias [1, H, Sq, Sk] (f32)."""
    context_position = jnp.arange(query_length, dtype=jnp.int32)[:, None]
    memory_position = jnp.arange(key_length, dtype=jnp.int32)[None, :]
    relative_position = memory_position - context_position
    buckets = _relative_position_bucket(
        relative_position,
        bidirectional=not IS_DECODER,
        num_buckets=NUM_BUCKETS,
        max_distance=MAX_DISTANCE,
    )
    values = rel_attn_bias_table[buckets]                # [Sq, Sk, H]
    values = jnp.transpose(values, (2, 0, 1))[None]      # [1, H, Sq, Sk]
    return values.astype(jnp.float32)


# ---------------------------------------------------------------------------
# Pallas kernel: one batch element per grid step, heads as a leading batch dim
# ---------------------------------------------------------------------------
def _attention_kernel(x_ref, wqkv_ref, wo_ref, bias_ref, out_ref):
    # x_ref:    (S, D)        compute_dtype   (batch dim squeezed by BlockSpec)
    # wqkv_ref: (H, D, 3*dk)  compute_dtype   (per-head fused [Wq|Wk|Wv])
    # wo_ref:   (H, dk, D)    compute_dtype
    # bias_ref: (H, S, S)     f32             (position bias [+ mask])
    # out_ref:  (S, D)        f32
    S, D = x_ref.shape
    H, _, dk3 = wqkv_ref.shape
    dk = dk3 // 3
    f32 = jnp.float32
    cdt = wqkv_ref.dtype                                  # MXU operand dtype

    x = x_ref[...]                                        # (S, D)
    # Replicate x across heads (cheap broadcast) so every contraction below is a
    # leading-batch batched matmul — clean MXU lowering, no in-kernel transposes.
    x_h = jnp.broadcast_to(x[None], (H, S, D))            # (H, S, D)

    # Fused per-head QKV projection: one batched MXU matmul, f32 accumulation.
    qkv = jnp.einsum('hsd,hdf->hsf', x_h, wqkv_ref[...],
                     preferred_element_type=f32)          # (H, S, 3*dk) f32
    q = qkv[..., 0 * dk:1 * dk].astype(cdt)               # (H, S, dk)
    k = qkv[..., 1 * dk:2 * dk].astype(cdt)
    v = qkv[..., 2 * dk:3 * dk].astype(cdt)

    # Scores (T5: no 1/sqrt(dk) scaling); bias added in f32.
    scores = jnp.einsum('hqd,hkd->hqk', q, k,
                        preferred_element_type=f32)       # (H, S, S) f32
    scores = scores + bias_ref[...]

    # f32 softmax over keys; EUP approximate reciprocal for the denominator.
    m = jnp.max(scores, axis=-1, keepdims=True)
    p = jnp.exp(scores - m)
    l = jnp.sum(p, axis=-1, keepdims=True)
    w = p * pl.reciprocal(l, approx=True)                 # (H, S, S) f32

    # TODO(synk): attention dropout omitted (inference / training=False).

    ctx = jnp.einsum('hqk,hkd->hqd', w.astype(cdt), v,
                     preferred_element_type=f32)          # (H, S, dk) f32

    # Per-head output projection, reduced over heads (== unshape + Wo).
    out_h = jnp.einsum('hsd,hdm->hsm', ctx.astype(cdt), wo_ref[...],
                       preferred_element_type=f32)        # (H, S, D) f32
    out_ref[...] = jnp.sum(out_h, axis=0).astype(out_ref.dtype)


def attention_forward(hidden_states, wq, wk, wv, wo, rel_attn_bias_table,
                      mask=None, compute_dtype=jnp.bfloat16):
    """Self-attention forward.

    Returns (attn_output [B,S,D], position_bias [1-or-B, H, S, S]).
    compute_dtype: MXU operand dtype (bf16 for v6e/v7x, f32 for exactness / v5e).
    """
    B, S, D = hidden_states.shape
    H, dk = N_HEADS, D_KV
    inner = H * dk

    # ---- position bias (plain JAX glue, identical to the torch module) -------
    if HAS_RELATIVE_ATTENTION_BIAS:
        position_bias = compute_bias(rel_attn_bias_table, S, S)       # (1,H,S,S)
    else:
        position_bias = jnp.zeros((1, H, S, S), jnp.float32)
    if mask is not None:
        position_bias = position_bias + mask          # may broadcast to (B,H,S,S)
    bias = position_bias.astype(jnp.float32)
    bias_b = bias.shape[0]                            # 1 (shared) or B (per-batch mask)

    # ---- per-head weight layout (host-side, free) so the kernel only ever
    # ---- issues leading-batch batched matmuls --------------------------------
    wq_h = wq.reshape(D, H, dk).transpose(1, 0, 2)                    # (H, D, dk)
    wk_h = wk.reshape(D, H, dk).transpose(1, 0, 2)
    wv_h = wv.reshape(D, H, dk).transpose(1, 0, 2)
    wqkv_h = jnp.concatenate([wq_h, wk_h, wv_h], axis=-1).astype(compute_dtype)
    wo_h = wo.reshape(H, dk, D).astype(compute_dtype)                 # (H, dk, D)
    x = hidden_states.astype(compute_dtype)                           # (B, S, D)

    bias_index = ((lambda b: (b, 0, 0, 0)) if bias_b == B
                  else (lambda b: (0, 0, 0, 0)))

    itemsize = jnp.dtype(compute_dtype).itemsize
    flops = (2 * B * S * D * 3 * inner          # fused QKV projection
             + 2 * B * H * S * S * dk           # scores
             + 2 * B * H * S * S * dk           # context
             + 2 * B * S * inner * D)           # output projection
    bytes_accessed = (B * S * D * itemsize                # x
                      + H * D * 3 * dk * itemsize         # wqkv
                      + H * dk * D * itemsize             # wo
                      + bias_b * H * S * S * 4            # bias
                      + B * S * D * 4)                    # out (f32)

    out = pl.pallas_call(
        _attention_kernel,
        out_shape=jax.ShapeDtypeStruct((B, S, D), hidden_states.dtype),
        grid=(B,),
        in_specs=[
            pl.BlockSpec((None, S, D), lambda b: (b, 0, 0)),        # x  (per batch)
            pl.BlockSpec((H, D, 3 * dk), lambda b: (0, 0, 0)),      # wqkv (resident)
            pl.BlockSpec((H, dk, D), lambda b: (0, 0, 0)),          # wo   (resident)
            pl.BlockSpec((None, H, S, S), bias_index),              # bias (+mask)
        ],
        out_specs=pl.BlockSpec((None, S, D), lambda b: (b, 0, 0)),
        compiler_params=pltpu.CompilerParams(
            dimension_semantics=("parallel",),
            vmem_limit_bytes=32 * 1024 * 1024),
        cost_estimate=pl.CostEstimate(
            flops=flops,
            transcendentals=B * H * S * S,
            bytes_accessed=bytes_accessed),
    )(x, wqkv_h, wo_h, bias)

    return out, position_bias


# ---------------------------------------------------------------------------
# Pure-JAX reference (for correctness check).  compute_dtype=float32 is the
# exact module semantics; compute_dtype=bfloat16 mirrors the kernel's mixed
# precision (bf16 MXU operands, f32 accumulation, f32 softmax).
# ---------------------------------------------------------------------------
def attention_ref(hidden_states, wq, wk, wv, wo, rel_attn_bias_table,
                  compute_dtype=jnp.float32):
    B, S, D = hidden_states.shape
    H, dk = N_HEADS, D_KV
    f32 = jnp.float32
    x = hidden_states.astype(compute_dtype)
    wq_c, wk_c, wv_c, wo_c = (w.astype(compute_dtype) for w in (wq, wk, wv, wo))

    q = jnp.einsum('bsd,df->bsf', x, wq_c, preferred_element_type=f32)
    k = jnp.einsum('bsd,df->bsf', x, wk_c, preferred_element_type=f32)
    v = jnp.einsum('bsd,df->bsf', x, wv_c, preferred_element_type=f32)

    def shape(t):
        return jnp.transpose(t.reshape(B, S, H, dk), (0, 2, 1, 3)).astype(compute_dtype)

    qh, kh, vh = shape(q), shape(k), shape(v)
    scores = jnp.einsum('bhqd,bhkd->bhqk', qh, kh, preferred_element_type=f32)
    bias = compute_bias(rel_attn_bias_table, S, S)
    scores = scores + bias
    m = jnp.max(scores, axis=-1, keepdims=True)
    p = jnp.exp(scores - m)
    w = p / jnp.sum(p, axis=-1, keepdims=True)
    ctx = jnp.einsum('bhqk,bhkd->bhqd', w.astype(compute_dtype), vh,
                     preferred_element_type=f32)
    ctx = jnp.transpose(ctx, (0, 2, 1, 3)).reshape(B, S, H * dk)
    out = jnp.einsum('bsf,fd->bsd', ctx.astype(compute_dtype), wo_c,
                     preferred_element_type=f32)
    return out, bias


# ---------------------------------------------------------------------------
if __name__ == "__main__":
    key = jax.random.PRNGKey(0)
    k_x, k_q, k_k, k_v, k_o, k_b = jax.random.split(key, 6)

    hidden_states = jax.random.normal(k_x, (BATCH, SEQ, D_MODEL), jnp.float32)

    # Deterministic parameters (shapes per nn.Linear / nn.Embedding in __init__),
    # stored as [in, out] for direct x @ W.
    scale = 1.0 / math.sqrt(D_MODEL)
    wq = jax.random.normal(k_q, (D_MODEL, INNER_DIM), jnp.float32) * scale
    wk = jax.random.normal(k_k, (D_MODEL, INNER_DIM), jnp.float32) * scale
    wv = jax.random.normal(k_v, (D_MODEL, INNER_DIM), jnp.float32) * scale
    wo = jax.random.normal(k_o, (INNER_DIM, D_MODEL), jnp.float32) * scale
    rel_attn_bias_table = jax.random.normal(
        k_b, (NUM_BUCKETS, N_HEADS), jnp.float32) * 0.1

    # Production path: bf16 MXU operands, f32 softmax (v6e / v7x).
    out_bf16, pos_bias = attention_forward(
        hidden_states, wq, wk, wv, wo, rel_attn_bias_table,
        compute_dtype=jnp.bfloat16)
    out_bf16 = jax.block_until_ready(out_bf16)
    pos_bias = jax.block_until_ready(pos_bias)

    # Exact path: f32 operands everywhere (v5e-friendly, tight correctness check).
    out_f32, _ = attention_forward(
        hidden_states, wq, wk, wv, wo, rel_attn_bias_table,
        compute_dtype=jnp.float32)
    out_f32 = jax.block_until_ready(out_f32)

    ref_f32, ref_bias = attention_ref(
        hidden_states, wq, wk, wv, wo, rel_attn_bias_table,
        compute_dtype=jnp.float32)
    ref_bf16, _ = attention_ref(
        hidden_states, wq, wk, wv, wo, rel_attn_bias_table,
        compute_dtype=jnp.bfloat16)

    assert out_bf16.shape == (BATCH, SEQ, D_MODEL)
    assert pos_bias.shape == (1, N_HEADS, SEQ, SEQ)

    # f32 kernel vs exact f32 reference: only the EUP approximate reciprocal in
    # the softmax denominator differs.
    assert jnp.allclose(out_f32, ref_f32, atol=5e-3, rtol=5e-3)
    # bf16 kernel vs precision-matched reference (bf16 operands, f32 accumulate).
    assert jnp.allclose(out_bf16, ref_bf16, atol=1e-2, rtol=1e-2)
    # Coarse sanity: bf16 kernel vs exact f32 semantics (bf16 rounding dominates).
    rel = jnp.linalg.norm(out_bf16 - ref_f32) / jnp.linalg.norm(ref_f32)
    assert rel < 0.1
    # Position bias is computed exactly (plain f32 JAX, identical code path).
    assert jnp.allclose(pos_bias, ref_bias, atol=1e-6, rtol=1e-6)

    print("KERNEL_OK")
</pallas_src>

<mosaic_0001>
module attributes {stable_mosaic.version = 11 : i64} {
  func.func @_attention_kernel(%arg0: i32, %arg1: memref<1x8x32xbf16, #tpu.memory_space<vmem>>, %arg2: memref<4x32x24xbf16, #tpu.memory_space<vmem>>, %arg3: memref<4x8x32xbf16, #tpu.memory_space<vmem>>, %arg4: memref<1x4x8x8xf32, #tpu.memory_space<vmem>>, %arg5: memref<1x8x32xf32, #tpu.memory_space<vmem>>) attributes {dimension_semantics = [#tpu.dimension_semantics<parallel>], iteration_bounds = array<i64: 2>, scalar_prefetch = 0 : i64, scratch_operands = 0 : i64, tpu.core_type = #tpu.core_type<tc>, window_params = [{transform_indices = @transform_0, window_bounds = array<i64: 1, 8, 32>}, {pipeline_mode = #tpu.pipeline_mode<synchronous>, transform_indices = @transform_1, window_bounds = array<i64: 4, 32, 24>}, {pipeline_mode = #tpu.pipeline_mode<synchronous>, transform_indices = @transform_2, window_bounds = array<i64: 4, 8, 32>}, {pipeline_mode = #tpu.pipeline_mode<synchronous>, transform_indices = @transform_3, window_bounds = array<i64: 1, 4, 8, 8>}, {transform_indices = @transform_4, window_bounds = array<i64: 1, 8, 32>}]} {
    %c0 = arith.constant 0 : index
    %c0_0 = arith.constant 0 : index
    %c0_1 = arith.constant 0 : index
    %0 = vector.load %arg1[%c0, %c0_0, %c0_1] : memref<1x8x32xbf16, #tpu.memory_space<vmem>>, vector<1x8x32xbf16>
    %1 = vector.shape_cast %0 : vector<1x8x32xbf16> to vector<8x32xbf16>
    %2 = vector.shape_cast %1 : vector<8x32xbf16> to vector<1x8x32xbf16>
    %3 = vector.shape_cast %2 : vector<1x8x32xbf16> to vector<1x8x32xbf16>
    %4 = vector.broadcast %3 : vector<1x8x32xbf16> to vector<4x8x32xbf16>
    %c0_2 = arith.constant 0 : index
    %c0_3 = arith.constant 0 : index
    %c0_4 = arith.constant 0 : index
    %5 = vector.load %arg2[%c0_2, %c0_3, %c0_4] : memref<4x32x24xbf16, #tpu.memory_space<vmem>>, vector<4x32x24xbf16>
    "tpu.trace_start"() <{level = 10 : i32, message = "hsd,hdf->hsf"}> : () -> ()
    %cst = arith.constant dense<0.000000e+00> : vector<4x8x24xf32>
    %6 = tpu.matmul %4, %5, %cst {dimension_numbers = #tpu.dot_dimension_numbers<[2], [1], [1], [2], [0, 0, 0, 1, 1, 2], [0], [0]>} : vector<4x8x32xbf16>, vector<4x32x24xbf16>, vector<4x8x24xf32> -> vector<4x8x24xf32>
    "tpu.trace_stop"() : () -> ()
    %7 = vector.extract_strided_slice %6 {offsets = [0, 0, 0], sizes = [4, 8, 8], strides = [1, 1, 1]} : vector<4x8x24xf32> to vector<4x8x8xf32>
    %8 = arith.truncf %7 : vector<4x8x8xf32> to vector<4x8x8xbf16>
    %9 = vector.extract_strided_slice %6 {offsets = [0, 0, 8], sizes = [4, 8, 8], strides = [1, 1, 1]} : vector<4x8x24xf32> to vector<4x8x8xf32>
    %10 = arith.truncf %9 : vector<4x8x8xf32> to vector<4x8x8xbf16>
    %11 = vector.extract_strided_slice %6 {offsets = [0, 0, 16], sizes = [4, 8, 8], strides = [1, 1, 1]} : vector<4x8x24xf32> to vector<4x8x8xf32>
    %12 = arith.truncf %11 : vector<4x8x8xf32> to vector<4x8x8xbf16>
    "tpu.trace_start"() <{level = 10 : i32, message = "hqd,hkd->hqk"}> : () -> ()
    %cst_5 = arith.constant dense<0.000000e+00> : vector<4x8x8xf32>
    %13 = tpu.matmul %8, %10, %cst_5 {dimension_numbers = #tpu.dot_dimension_numbers<[2], [2], [1], [1], [0, 0, 0, 1, 1, 1], [0], [0]>} : vector<4x8x8xbf16>, vector<4x8x8xbf16>, vector<4x8x8xf32> -> vector<4x8x8xf32>
    "tpu.trace_stop"() : () -> ()
    %c0_6 = arith.constant 0 : index
    %c0_7 = arith.constant 0 : index
    %c0_8 = arith.constant 0 : index
    %c0_9 = arith.constant 0 : index
    %14 = vector.load %arg4[%c0_6, %c0_7, %c0_8, %c0_9] : memref<1x4x8x8xf32, #tpu.memory_space<vmem>>, vector<1x4x8x8xf32>
    %15 = vector.shape_cast %14 : vector<1x4x8x8xf32> to vector<4x8x8xf32>
    %16 = arith.addf %13, %15 : vector<4x8x8xf32>
    %cst_10 = arith.constant dense<0xFF800000> : vector<4x8xf32>
    %17 = vector.multi_reduction <maximumf>, %16, %cst_10 [2] : vector<4x8x8xf32> to vector<4x8xf32>
    %18 = vector.shape_cast %17 : vector<4x8xf32> to vector<4x8x1xf32>
    %19 = vector.broadcast %18 : vector<4x8x1xf32> to vector<4x8x8xf32>
    %20 = arith.subf %16, %19 : vector<4x8x8xf32>
    %21 = math.exp %20 : vector<4x8x8xf32>
    %cst_11 = arith.constant dense<0.000000e+00> : vector<4x8xf32>
    %22 = vector.multi_reduction <add>, %21, %cst_11 [2] : vector<4x8x8xf32> to vector<4x8xf32>
    %23 = vector.shape_cast %22 : vector<4x8xf32> to vector<4x8x1xf32>
    %24 = tpu.reciprocal %23 {approx = true} : vector<4x8x1xf32> -> vector<4x8x1xf32>
    %25 = vector.broadcast %24 : vector<4x8x1xf32> to vector<4x8x8xf32>
    %26 = arith.mulf %21, %25 : vector<4x8x8xf32>
    %27 = arith.truncf %26 : vector<4x8x8xf32> to vector<4x8x8xbf16>
    "tpu.trace_start"() <{level = 10 : i32, message = "hqk,hkd->hqd"}> : () -> ()
    %cst_12 = arith.constant dense<0.000000e+00> : vector<4x8x8xf32>
    %28 = tpu.matmul %27, %12, %cst_12 {dimension_numbers = #tpu.dot_dimension_numbers<[2], [1], [1], [2], [0, 0, 0, 1, 1, 2], [0], [0]>} : vector<4x8x8xbf16>, vector<4x8x8xbf16>, vector<4x8x8xf32> -> vector<4x8x8xf32>
    "tpu.trace_stop"() : () -> ()
    %29 = arith.truncf %28 : vector<4x8x8xf32> to vector<4x8x8xbf16>
    %c0_13 = arith.constant 0 : index
    %c0_14 = arith.constant 0 : index
    %c0_15 = arith.constant 0 : index
    %30 = vector.load %arg3[%c0_13, %c0_14, %c0_15] : memref<4x8x32xbf16, #tpu.memory_space<vmem>>, vector<4x8x32xbf16>
    "tpu.trace_start"() <{level = 10 : i32, message = "hsd,hdm->hsm"}> : () -> ()
    %cst_16 = arith.constant dense<0.000000e+00> : vector<4x8x32xf32>
    %31 = tpu.matmul %29, %30, %cst_16 {dimension_numbers = #tpu.dot_dimension_numbers<[2], [1], [1], [2], [0, 0, 0, 1, 1, 2], [0], [0]>} : vector<4x8x8xbf16>, vector<4x8x32xbf16>, vector<4x8x32xf32> -> vector<4x8x32xf32>
    "tpu.trace_stop"() : () -> ()
    %cst_17 = arith.constant dense<0.000000e+00> : vector<8x32xf32>
    %32 = vector.multi_reduction <add>, %31, %cst_17 [0] : vector<4x8x32xf32> to vector<8x32xf32>
    %c0_18 = arith.constant 0 : index
    %c0_19 = arith.constant 0 : index
    %c0_20 = arith.constant 0 : index
    %33 = vector.load %arg5[%c0_18, %c0_19, %c0_20] : memref<1x8x32xf32, #tpu.memory_space<vmem>>, vector<1x8x32xf32>
    %34 = vector.shape_cast %33 : vector<1x8x32xf32> to vector<8x32xf32>
    %35 = vector.shape_cast %32 : vector<8x32xf32> to vector<1x8x32xf32>
    tpu.vector_store %arg5[%c0_18, %c0_19, %c0_20], %35 {strides = array<i32>} : memref<1x8x32xf32, #tpu.memory_space<vmem>>, vector<1x8x32xf32>,
    return
  }
  func.func @transform_0(%arg0: i32) -> (i32, i32, i32) {
    %c0_i32 = arith.constant 0 : i32
    %c0_i32_0 = arith.constant 0 : i32
    %c0_i32_1 = arith.constant 0 : i32
    return %arg0, %c0_i32, %c0_i32_0 : i32, i32, i32
  }
  func.func @transform_1(%arg0: i32) -> (i32, i32, i32) {
    %c0_i32 = arith.constant 0 : i32
    %c0_i32_0 = arith.constant 0 : i32
    %c0_i32_1 = arith.constant 0 : i32
    %c0_i32_2 = arith.constant 0 : i32
    return %c0_i32, %c0_i32_0, %c0_i32_1 : i32, i32, i32
  }
  func.func @transform_2(%arg0: i32) -> (i32, i32, i32) {
    %c0_i32 = arith.constant 0 : i32
    %c0_i32_0 = arith.constant 0 : i32
    %c0_i32_1 = arith.constant 0 : i32
    %c0_i32_2 = arith.constant 0 : i32
    return %c0_i32, %c0_i32_0, %c0_i32_1 : i32, i32, i32
  }
  func.func @transform_3(%arg0: i32) -> (i32, i32, i32, i32) {
    %c0_i32 = arith.constant 0 : i32
    %c0_i32_0 = arith.constant 0 : i32
    %c0_i32_1 = arith.constant 0 : i32
    %c0_i32_2 = arith.constant 0 : i32
    %c0_i32_3 = arith.constant 0 : i32
    return %c0_i32, %c0_i32_0, %c0_i32_1, %c0_i32_2 : i32, i32, i32, i32
  }
  func.func @transform_4(%arg0: i32) -> (i32, i32, i32) {
    %c0_i32 = arith.constant 0 : i32
    %c0_i32_0 = arith.constant 0 : i32
    %c0_i32_1 = arith.constant 0 : i32
    return %arg0, %c0_i32, %c0_i32_0 : i32, i32, i32
  }
}

</mosaic_0001>

<llo_original>
// kernel: tpu_custom_call.1
$region0: #{tpu_custom_call.1}
  #allocation0 [shape = 'u32[]', space=smem, size = 0x4, offset = 0x4, fixed_abs, tag = 'smem constant byte address 0x4 - core index']
  #allocation1 [shape = 'u32[144,128]{1,0:T(1,128)}', space=vmem, size = 0x12000, scoped, tag = 'internal scratch']
  %s0 = inlined_call_operand.vmem [shape: bf16[2,8,32], index: 0, kind: input, shape index: {}]
  %s1 = inlined_call_operand.vmem [shape: bf16[4,32,24], index: 1, kind: input, shape index: {}]
  %s2 = inlined_call_operand.vmem [shape: bf16[4,8,32], index: 2, kind: input, shape index: {}]
  %s3 = inlined_call_operand.vmem [shape: f32[1,4,8,8], index: 3, kind: input, shape index: {}]
  %s4 = inlined_call_operand.hbm [shape: f32[2,8,32], index: 4, kind: output, shape index: {}]
  %s5 = sld [smem:[#allocation0]]
  $region49: #{tpu_custom_call.1} parent=0
    _
  %s7 = ssub.s32 1, %s5
  %s8 = scalar_select 0, %s7, %s5
  $region1: #{tpu_custom_call.1} parent=0
    #allocation2 [shape = 'u8[8192]{0}', space=vmem, size = 0x2000, scoped, tag = 'output window, operand 0']
    #allocation3 [shape = 's32[2]{0}', space=sflag, size = 0x8, scoped, tag = 'scoped memory for tpu_custom_call.1']
    %9 = vsyncpa [#allocation3], 0
    %s10 = scalar_lea.sflag [#allocation3], 1
    %11 = vsyncpa %s10, 0
    loop: start=0, step=1, limit=4
    $region2: #{tpu_custom_call.1} parent=1 // loop_pre_header
      _
    $region3: #{tpu_custom_call.1} parent=1 // loop_header
      %s13 = sphi 0, %s17
      %p14 = scmp.ge.s32.totalorder %s13, 4
      %s23 = sphi 0, %s25
      %s26 = sphi 0, %s23
      %s27 = sphi 0, %s26
      %s43 = sphi 0, %s27
      %s47 = sphi 0, %s47
      %s49 = sphi 0, %s47
      %s50 = sphi 0, %s49
      %s64 = sphi 0, %s50
      %s68 = sphi 0, %s68
      %s70 = sphi 0, %s68
      %s71 = sphi 0, %s70
      %s85 = sphi 0, %s71
      %s89 = sphi 0, %s89
      %s91 = sphi 0, %s89
      %s92 = sphi 0, %s91
      %s106 = sphi 0, %s92
      %s112 = sphi 0, %s114
      %s115 = sphi 0, %s112
      %s116 = sphi 0, %s115
      %s132 = sphi 0, %s116
    $region4: #{tpu_custom_call.1} parent=1 // loop_header_branch
      %16 = sbr.rel (%p14) target = $region8
    $region5: #{tpu_custom_call.1} parent=1 // loop_body
      %s18 = ssub.s32 %s13, 1
      %s19 = ssub.s32 %s13, 2
      %s20 = sadd.s32 %s13, 1
      %s21 = ssub.s32 %s13, %s20
      %p22 = scmp.eq.s32.totalorder %s21, 0
      %s24 = sadd.s32 %s23, 1
      %s25 = scalar_select %p22, %s23, %s24
      %p28 = pneg %p22
      %p29 = scmp.eq.s32.totalorder %s13, 1
      %p30 = por %p28, %p29
      %p31 = scmp.ne.s32.totalorder %s23, %s26
      %p32 = scmp.eq.s32.totalorder %s13, 0
      %p33 = por %p31, %p32
      %p34 = scmp.ne.s32.totalorder %s23, %s26
      %p35 = scmp.eq.s32.totalorder %s18, 1
      %p36 = por %p34, %p35
      %p37 = scmp.ne.s32.totalorder %s26, %s27
      %p38 = scmp.eq.s32.totalorder %s18, 0
      %p39 = por %p37, %p38
      %p40 = scmp.ne.s32.totalorder %s26, %s27
      %p41 = scmp.eq.s32.totalorder %s19, 1
      %p42 = por %p40, %p41
      %p44 = scmp.ne.s32.totalorder %s27, %s43
      %p45 = scmp.eq.s32.totalorder %s19, 0
      %p46 = por %p44, %p45
      %s48 = sadd.s32 %s47, 1
      %p51 = scmp.eq.s32.totalorder %s13, 1
      %p52 = scmp.ne.s32.totalorder %s47, %s49
      %p53 = scmp.eq.s32.totalorder %s13, 0
      %p54 = por %p52, %p53
      %p55 = scmp.ne.s32.totalorder %s47, %s49
      %p56 = scmp.eq.s32.totalorder %s18, 1
      %p57 = por %p55, %p56
      %p58 = scmp.ne.s32.totalorder %s49, %s50
      %p59 = scmp.eq.s32.totalorder %s18, 0
      %p60 = por %p58, %p59
      %p61 = scmp.ne.s32.totalorder %s49, %s50
      %p62 = scmp.eq.s32.totalorder %s19, 1
      %p63 = por %p61, %p62
      %p65 = scmp.ne.s32.totalorder %s50, %s64
      %p66 = scmp.eq.s32.totalorder %s19, 0
      %p67 = por %p65, %p66
      %s69 = sadd.s32 %s68, 1
      %p72 = scmp.eq.s32.totalorder %s13, 1
      %p73 = scmp.ne.s32.totalorder %s68, %s70
      %p74 = scmp.eq.s32.totalorder %s13, 0
      %p75 = por %p73, %p74
      %p76 = scmp.ne.s32.totalorder %s68, %s70
      %p77 = scmp.eq.s32.totalorder %s18, 1
      %p78 = por %p76, %p77
      %p79 = scmp.ne.s32.totalorder %s70, %s71
      %p80 = scmp.eq.s32.totalorder %s18, 0
      %p81 = por %p79, %p80
      %p82 = scmp.ne.s32.totalorder %s70, %s71
      %p83 = scmp.eq.s32.totalorder %s19, 1
      %p84 = por %p82, %p83
      %p86 = scmp.ne.s32.totalorder %s71, %s85
      %p87 = scmp.eq.s32.totalorder %s19, 0
      %p88 = por %p86, %p87
      %s90 = sadd.s32 %s89, 1
      %p93 = scmp.eq.s32.totalorder %s13, 1
      %p94 = scmp.ne.s32.totalorder %s89, %s91
      %p95 = scmp.eq.s32.totalorder %s13, 0
      %p96 = por %p94, %p95
      %p97 = scmp.ne.s32.totalorder %s89, %s91
      %p98 = scmp.eq.s32.totalorder %s18, 1
      %p99 = por %p97, %p98
      %p100 = scmp.ne.s32.totalorder %s91, %s92
      %p101 = scmp.eq.s32.totalorder %s18, 0
      %p102 = por %p100, %p101
      %p103 = scmp.ne.s32.totalorder %s91, %s92
      %p104 = scmp.eq.s32.totalorder %s19, 1
      %p105 = por %p103, %p104
      %p107 = scmp.ne.s32.totalorder %s92, %s106
      %p108 = scmp.eq.s32.totalorder %s19, 0
      %p109 = por %p107, %p108
      %s110 = ssub.s32 %s13, %s20
      %p111 = scmp.eq.s32.totalorder %s110, 0
      %s113 = sadd.s32 %s112, 1
      %s114 = scalar_select %p111, %s112, %s113
      %p117 = pneg %p111
      %p118 = scmp.eq.s32.totalorder %s13, 1
      %p119 = por %p117, %p118
      %p120 = scmp.ne.s32.totalorder %s112, %s115
      %p121 = scmp.eq.s32.totalorder %s13, 0
      %p122 = por %p120, %p121
      %p123 = scmp.ne.s32.totalorder %s112, %s115
      %p124 = scmp.eq.s32.totalorder %s18, 1
      %p125 = por %p123, %p124
      %p126 = scmp.ne.s32.totalorder %s115, %s116
      %p127 = scmp.eq.s32.totalorder %s18, 0
      %p128 = por %p126, %p127
      %p129 = scmp.ne.s32.totalorder %s115, %s116
      %p130 = scmp.eq.s32.totalorder %s19, 1
      %p131 = por %p129, %p130
      %p133 = scmp.ne.s32.totalorder %s116, %s132
      %p134 = scmp.eq.s32.totalorder %s19, 0
      %p135 = por %p133, %p134
      %p136 = scmp.le.s32.totalorder 1, %s13
      %p137 = scmp.lt.s32.totalorder %s13, 3
      %p138 = pnand %p136, %p137
      %p139 = pneg %p138
      // Predicated region
      $region9: #{tpu_custom_call.1} parent=5 // pred_check
        _
      $region10: #{tpu_custom_call.1} parent=5 // pred_check_branch
        %141 = sbr.rel (%p138) target = $region12
      $region11: #{tpu_custom_call.1} parent=5 // pred_region
        %s142 = ssub.s32 %s13, 1
        // Predicated region
        $region13: #{tpu_custom_call.1} parent=11 // pred_check
          %p143 = pneg %p60
        $region14: #{tpu_custom_call.1} parent=11 // pred_check_branch
          %145 = sbr.rel (%p143) target = $region16
        $region15: #{tpu_custom_call.1} parent=11 // pred_region
          _
        $region16: #{tpu_custom_call.1} parent=11 // pred_fallthru
          _
        // Predicated region
        $region17: #{tpu_custom_call.1} parent=11 // pred_check
          %p146 = pneg %p81
        $region18: #{tpu_custom_call.1} parent=11 // pred_check_branch
          %148 = sbr.rel (%p146) target = $region20
        $region19: #{tpu_custom_call.1} parent=11 // pred_region
          _
        $region20: #{tpu_custom_call.1} parent=11 // pred_fallthru
          _
        // Predicated region
        $region21: #{tpu_custom_call.1} parent=11 // pred_check
          %p149 = pneg %p102
        $region22: #{tpu_custom_call.1} parent=11 // pred_check_branch
          %151 = sbr.rel (%p149) target = $region24
        $region23: #{tpu_custom_call.1} parent=11 // pred_region
          _
        $region24: #{tpu_custom_call.1} parent=11 // pred_fallthru
          _
      $region12: #{tpu_custom_call.1} parent=5 // pred_fallthru
        _
      %p152 = scmp.lt.s32.totalorder %s13, 2
      // Predicated region
      $region25: #{tpu_custom_call.1} parent=5 // pred_check
        %p153 = pneg %p152
      $region26: #{tpu_custom_call.1} parent=5 // pred_check_branch
        %155 = sbr.rel (%p153) target = $region28
      $region27: #{tpu_custom_call.1} parent=5 // pred_region
        // Predicated region
        $region29: #{tpu_custom_call.1} parent=27 // pred_check
          %p156 = pneg %p33
        $region30: #{tpu_custom_call.1} parent=27 // pred_check_branch
          %158 = sbr.rel (%p156) target = $region32
        $region31: #{tpu_custom_call.1} parent=27 // pred_region
          %p159 = scmp.lt.s32.totalorder %s13, 1
          %s160 = scalar_select %p159, %s13, 1
          %s161 = smul.addr %s160, 4
          %s162 = scalar_lea.vmem %s0, %s161
        $region32: #{tpu_custom_call.1} parent=27 // pred_fallthru
          _
      $region28: #{tpu_custom_call.1} parent=5 // pred_fallthru
        _
      %p163 = scmp.le.s32.totalorder 1, %s13
      %p164 = scmp.lt.s32.totalorder %s13, 3
      %p165 = pnand %p163, %p164
      %p166 = pneg %p165
      // Predicated region
      $region33: #{tpu_custom_call.1} parent=5 // pred_check
        _
      $region34: #{tpu_custom_call.1} parent=5 // pred_check_branch
        %168 = sbr.rel (%p165) target = $region36
      $region35: #{tpu_custom_call.1} parent=5 // pred_region
        %s169 = ssub.s32 %s13, 1
        %p170 = scmp.lt.s32.totalorder %s18, 1
        %s171 = scalar_select %p170, %s18, 1
        %s172 = smul.addr %s171, 4
        %s173 = scalar_lea.vmem %s0, %s172
        %p174 = pneg %p39
        %p175 = pneg %p36
        %p176 = pneg %p60
        %p177 = pneg %p57
        %p178 = pneg %p81
        %p179 = pneg %p78
        %p180 = pneg %p102
        %p181 = pneg %p99
        %p182 = pneg %p128
        %p183 = pneg %p125
        %s184 = sand.u32 %s115, 1
        %s185 = scalar_lea.sflag [#allocation3], %s184
        %s186 = sand.u32 %s115, 1
        %s187 = smul.addr %s186, 8
        %s188 = scalar_lea.vmem [#allocation2], %s187
        %p189 = scmp.lt.s32.totalorder %s18, 1
        %s190 = scalar_select %p189, %s18, 1
        %s191 = smul.addr %s190, 4
        %s192 = scalar_lea.vmem %s0, %s191
        %v194 = vld [vmem:[%s192] sm:$0xf]
        %v195 = vld [vmem:[%s1] sm:$0xf]
        %v196 = vld [vmem:[%s1 + $0x4] sm:$0xf]
        %v197 = vld [vmem:[%s1 + $0x8] sm:$0xf]
        %v198 = vld [vmem:[%s1 + $0xc] sm:$0xf]
        %v199 = vld [vmem:[%s1 + $0x10] sm:$0xf]
        %v200 = vld [vmem:[%s1 + $0x14] sm:$0xf]
        %v201 = vld [vmem:[%s1 + $0x18] sm:$0xf]
        %v202 = vld [vmem:[%s1 + $0x1c] sm:$0xf]
        %v203 = vld [vmem:[%s1 + $0x20] sm:$0xf]
        %v204 = vld [vmem:[%s1 + $0x24] sm:$0xf]
        %v205 = vld [vmem:[%s1 + $0x28] sm:$0xf]
        %v206 = vld [vmem:[%s1 + $0x2c] sm:$0xf]
        %v207 = vld [vmem:[%s1 + $0x30] sm:$0xf]
        %v208 = vld [vmem:[%s1 + $0x34] sm:$0xf]
        %v209 = vld [vmem:[%s1 + $0x38] sm:$0xf]
        %v210 = vld [vmem:[%s1 + $0x3c] sm:$0xf]
        %v215 = vunpack.c.l.b16 %v195
        %v216 = vunpack.c.l.b16 %v196
        %v217 = vunpack.c.l.b16 %v197
        %v218 = vunpack.c.l.b16 %v198
        %v219 = vpack.c.b16 %v216, %v215
        %v220 = vpack.c.b16 %v218, %v217
        %vm223 = vcmask 261120
        %v225 = vsel %vm223, %v194, 0
        %227 = vmatprep.subr.bf16.mxu0 0
        %228 = vmatpush1.bf16.msra.mxu0 %v219
        %229 = vmatprep.subr.bf16.mxu0 0
        %230 = vmatpush1.bf16.msra.mxu0 %v220
        %231 = vmatprep.subr.bf16.mxu0 0
        %232 = vmatpush1.bf16.msra.mxu0 0
        %233 = vmatprep.subr.bf16.mxu0 0
        %234 = vmatpush1.bf16.msra.mxu0 0
        %235 = vmatprep.subr.bf16.mxu0 0
        %236 = vmatpush1.bf16.msra.mxu0 0
        %237 = vmatprep.subr.bf16.mxu0 0
        %238 = vmatpush1.bf16.msra.mxu0 0
        %239 = vmatprep.subr.bf16.mxu0 0
        %240 = vmatpush1.bf16.msra.mxu0 0
        %241 = vmatprep.subr.bf16.mxu0 0
        %242 = vmatpush1.bf16.msra.mxu0 0
        %243 = vmatprep.subr.bf16.mxu0 0
        %244 = vmatpush1.bf16.msra.mxu0 0
        %245 = vmatprep.subr.bf16.mxu0 0
        %246 = vmatpush1.bf16.msra.mxu0 0
        %247 = vmatprep.subr.bf16.mxu0 0
        %248 = vmatpush1.bf16.msra.mxu0 0
        %249 = vmatprep.subr.bf16.mxu0 0
        %250 = vmatpush1.bf16.msra.mxu0 0
        %251 = vmatprep.subr.bf16.mxu0 0
        %252 = vmatpush1.bf16.msra.mxu0 0
        %253 = vmatprep.subr.bf16.mxu0 0
        %254 = vmatpush1.bf16.msra.mxu0 0
        %255 = vmatprep.subr.bf16.mxu0 0
        %256 = vmatpush1.bf16.msra.mxu0 0
        %257 = vmatprep.subr.bf16.mxu0 0
        %258 = vmatpush1.bf16.msra.mxu0 0
        %259 = vmatprep.mubr.bf16.mxu0 0
        %260 = vmatmul.mubr.bf16.gmra.mrb[0].mxu0 %v225
        %v261 = vpop.f32.mrb[0].mxu0
        %v262 = vadd.f32 0.0, %v261
        %v263 = vpop.f32.mrb[0].mxu0
        %v264 = vpop.f32.mrb[0].mxu0
        %v265 = vpop.f32.mrb[0].mxu0
        %266 = vdwg.mxu0
        %v271 = vunpack.c.l.b16 %v199
        %v272 = vunpack.c.l.b16 %v200
        %v273 = vunpack.c.l.b16 %v201
        %v274 = vunpack.c.l.b16 %v202
        %v275 = vpack.c.b16 %v272, %v271
        %v276 = vpack.c.b16 %v274, %v273
        %279 = vmatprep.subr.bf16.mxu0 0
        %280 = vmatpush1.bf16.msra.mxu0 %v275
        %281 = vmatprep.subr.bf16.mxu0 0
        %282 = vmatpush1.bf16.msra.mxu0 %v276
        %283 = vmatprep.subr.bf16.mxu0 0
        %284 = vmatpush1.bf16.msra.mxu0 0
        %285 = vmatprep.subr.bf16.mxu0 0
        %286 = vmatpush1.bf16.msra.mxu0 0
        %287 = vmatprep.subr.bf16.mxu0 0
        %288 = vmatpush1.bf16.msra.mxu0 0
        %289 = vmatprep.subr.bf16.mxu0 0
        %290 = vmatpush1.bf16.msra.mxu0 0
        %291 = vmatprep.subr.bf16.mxu0 0
        %292 = vmatpush1.bf16.msra.mxu0 0
        %293 = vmatprep.subr.bf16.mxu0 0
        %294 = vmatpush1.bf16.msra.mxu0 0
        %295 = vmatprep.subr.bf16.mxu0 0
        %296 = vmatpush1.bf16.msra.mxu0 0
        %297 = vmatprep.subr.bf16.mxu0 0
        %298 = vmatpush1.bf16.msra.mxu0 0
        %299 = vmatprep.subr.bf16.mxu0 0
        %300 = vmatpush1.bf16.msra.mxu0 0
        %301 = vmatprep.subr.bf16.mxu0 0
        %302 = vmatpush1.bf16.msra.mxu0 0
        %303 = vmatprep.subr.bf16.mxu0 0
        %304 = vmatpush1.bf16.msra.mxu0 0
        %305 = vmatprep.subr.bf16.mxu0 0
        %306 = vmatpush1.bf16.msra.mxu0 0
        %307 = vmatprep.subr.bf16.mxu0 0
        %308 = vmatpush1.bf16.msra.mxu0 0
        %309 = vmatprep.subr.bf16.mxu0 0
        %310 = vmatpush1.bf16.msra.mxu0 0
        %311 = vmatprep.mubr.bf16.mxu0 0
        %312 = vmatmul.mubr.bf16.gmra.mrb[0].mxu0 %v225
        %v313 = vpop.f32.mrb[0].mxu0
        %v314 = vadd.f32 0.0, %v313
        %v315 = vpop.f32.mrb[0].mxu0
        %v316 = vpop.f32.mrb[0].mxu0
        %v317 = vpop.f32.mrb[0].mxu0
        %318 = vdwg.mxu0
        %v323 = vunpack.c.l.b16 %v203
        %v324 = vunpack.c.l.b16 %v204
        %v325 = vunpack.c.l.b16 %v205
        %v326 = vunpack.c.l.b16 %v206
        %v327 = vpack.c.b16 %v324, %v323
        %v328 = vpack.c.b16 %v326, %v325
        %331 = vmatprep.subr.bf16.mxu0 0
        %332 = vmatpush1.bf16.msra.mxu0 %v327
        %333 = vmatprep.subr.bf16.mxu0 0
        %334 = vmatpush1.bf16.msra.mxu0 %v328
        %335 = vmatprep.subr.bf16.mxu0 0
        %336 = vmatpush1.bf16.msra.mxu0 0
        %337 = vmatprep.subr.bf16.mxu0 0
        %338 = vmatpush1.bf16.msra.mxu0 0
        %339 = vmatprep.subr.bf16.mxu0 0
        %340 = vmatpush1.bf16.msra.mxu0 0
        %341 = vmatprep.subr.bf16.mxu0 0
        %342 = vmatpush1.bf16.msra.mxu0 0
        %343 = vmatprep.subr.bf16.mxu0 0
        %344 = vmatpush1.bf16.msra.mxu0 0
        %345 = vmatprep.subr.bf16.mxu0 0
        %346 = vmatpush1.bf16.msra.mxu0 0
        %347 = vmatprep.subr.bf16.mxu0 0
        %348 = vmatpush1.bf16.msra.mxu0 0
        %349 = vmatprep.subr.bf16.mxu0 0
        %350 = vmatpush1.bf16.msra.mxu0 0
        %351 = vmatprep.subr.bf16.mxu0 0
        %352 = vmatpush1.bf16.msra.mxu0 0
        %353 = vmatprep.subr.bf16.mxu0 0
        %354 = vmatpush1.bf16.msra.mxu0 0
        %355 = vmatprep.subr.bf16.mxu0 0
        %356 = vmatpush1.bf16.msra.mxu0 0
        %357 = vmatprep.subr.bf16.mxu0 0
        %358 = vmatpush1.bf16.msra.mxu0 0
        %359 = vmatprep.subr.bf16.mxu0 0
        %360 = vmatpush1.bf16.msra.mxu0 0
        %361 = vmatprep.subr.bf16.mxu0 0
        %362 = vmatpush1.bf16.msra.mxu0 0
        %363 = vmatprep.mubr.bf16.mxu0 0
        %364 = vmatmul.mubr.bf16.gmra.mrb[0].mxu0 %v225
        %v365 = vpop.f32.mrb[0].mxu0
        %v366 = vadd.f32 0.0, %v365
        %v367 = vpop.f32.mrb[0].mxu0
        %v368 = vpop.f32.mrb[0].mxu0
        %v369 = vpop.f32.mrb[0].mxu0
        %370 = vdwg.mxu0
        %v375 = vunpack.c.l.b16 %v207
        %v376 = vunpack.c.l.b16 %v208
        %v377 = vunpack.c.l.b16 %v209
        %v378 = vunpack.c.l.b16 %v210
        %v379 = vpack.c.b16 %v376, %v375
        %v380 = vpack.c.b16 %v378, %v377
        %383 = vmatprep.subr.bf16.mxu0 0
        %384 = vmatpush1.bf16.msra.mxu0 %v379
        %385 = vmatprep.subr.bf16.mxu0 0
        %386 = vmatpush1.bf16.msra.mxu0 %v380
        %387 = vmatprep.subr.bf16.mxu0 0
        %388 = vmatpush1.bf16.msra.mxu0 0
        %389 = vmatprep.subr.bf16.mxu0 0
        %390 = vmatpush1.bf16.msra.mxu0 0
        %391 = vmatprep.subr.bf16.mxu0 0
        %392 = vmatpush1.bf16.msra.mxu0 0
        %393 = vmatprep.subr.bf16.mxu0 0
        %394 = vmatpush1.bf16.msra.mxu0 0
        %395 = vmatprep.subr.bf16.mxu0 0
        %396 = vmatpush1.bf16.msra.mxu0 0
        %397 = vmatprep.subr.bf16.mxu0 0
        %398 = vmatpush1.bf16.msra.mxu0 0
        %399 = vmatprep.subr.bf16.mxu0 0
        %400 = vmatpush1.bf16.msra.mxu0 0
        %401 = vmatprep.subr.bf16.mxu0 0
        %402 = vmatpush1.bf16.msra.mxu0 0
        %403 = vmatprep.subr.bf16.mxu0 0
        %404 = vmatpush1.bf16.msra.mxu0 0
        %405 = vmatprep.subr.bf16.mxu0 0
        %406 = vmatpush1.bf16.msra.mxu0 0
        %407 = vmatprep.subr.bf16.mxu0 0
        %408 = vmatpush1.bf16.msra.mxu0 0
        %409 = vmatprep.subr.bf16.mxu0 0
        %410 = vmatpush1.bf16.msra.mxu0 0
        %411 = vmatprep.subr.bf16.mxu0 0
        %412 = vmatpush1.bf16.msra.mxu0 0
        %413 = vmatprep.subr.bf16.mxu0 0
        %414 = vmatpush1.bf16.msra.mxu0 0
        %415 = vmatprep.mubr.bf16.mxu0 0
        %416 = vmatmul.mubr.bf16.gmra.mrb[0].mxu0 %v225
        %v417 = vpop.f32.mrb[0].mxu0
        %v418 = vadd.f32 0.0, %v417
        %v419 = vpop.f32.mrb[0].mxu0
        %v420 = vpop.f32.mrb[0].mxu0
        %v421 = vpop.f32.mrb[0].mxu0
        %422 = vdwg.mxu0
        %v423 = vpack.c.bf16 %v262, %v262
        %v424 = vpack.c.bf16 %v314, %v314
        %v425 = vpack.c.bf16 %v366, %v366
        %v426 = vpack.c.bf16 %v418, %v418
        %v427 = vld [vmem:[%s3] sm:$0xff]
        %v428 = vld [vmem:[%s3 + $0x8] sm:$0xff]
        %v429 = vld [vmem:[%s3 + $0x10] sm:$0xff]
        %v430 = vld [vmem:[%s3 + $0x18] sm:$0xff]
        %432 = vrot.lane.b32.xlu0 %v423, 120
        %v433 = vpop.permute.xlu0 %432
        %vm434 = vcmask 64512
        %v436 = vsel %vm434, %v423, 0
        %v439 = vsel %vm434, %v433, 0
        %441 = vmatprep.subr.bf16.mxu0 0
        %442 = vmatpush1.bf16.xpose.msra.mxu0 %v439
        %443 = vmatprep.subr.bf16.mxu0 0
        %444 = vmatpush1.bf16.xpose.msra.mxu0 0
        %445 = vmatprep.subr.bf16.mxu0 0
        %446 = vmatpush1.bf16.xpose.msra.mxu0 0
        %447 = vmatprep.subr.bf16.mxu0 0
        %448 = vmatpush1.bf16.xpose.msra.mxu0 0
        %449 = vmatprep.subr.bf16.mxu0 0
        %450 = vmatpush1.bf16.xpose.msra.mxu0 0
        %451 = vmatprep.subr.bf16.mxu0 0
        %452 = vmatpush1.bf16.xpose.msra.mxu0 0
        %453 = vmatprep.subr.bf16.mxu0 0
        %454 = vmatpush1.bf16.xpose.msra.mxu0 0
        %455 = vmatprep.subr.bf16.mxu0 0
        %456 = vmatpush1.bf16.xpose.msra.mxu0 0
        %457 = vmatprep.subr.bf16.mxu0 0
        %458 = vmatpush1.bf16.xpose.msra.mxu0 0
        %459 = vmatprep.subr.bf16.mxu0 0
        %460 = vmatpush1.bf16.xpose.msra.mxu0 0
        %461 = vmatprep.subr.bf16.mxu0 0
        %462 = vmatpush1.bf16.xpose.msra.mxu0 0
        %463 = vmatprep.subr.bf16.mxu0 0
        %464 = vmatpush1.bf16.xpose.msra.mxu0 0
        %465 = vmatprep.subr.bf16.mxu0 0
        %466 = vmatpush1.bf16.xpose.msra.mxu0 0
        %467 = vmatprep.subr.bf16.mxu0 0
        %468 = vmatpush1.bf16.xpose.msra.mxu0 0
        %469 = vmatprep.subr.bf16.mxu0 0
        %470 = vmatpush1.bf16.xpose.msra.mxu0 0
        %471 = vmatprep.subr.bf16.mxu0 0
        %472 = vmatpush1.bf16.xpose.msra.mxu0 0
        %473 = vmatprep.mubr.bf16.mxu0 0
        %474 = vmatmul.mubr.bf16.gmra.mrb[0].mxu0 %v436
        %v475 = vpop.f32.mrb[0].mxu0
        %v476 = vadd.f32 %v427, %v475
        %v477 = vpop.f32.mrb[0].mxu0
        %v478 = vpop.f32.mrb[0].mxu0
        %v479 = vpop.f32.mrb[0].mxu0
        %480 = vdwg.mxu0
        %482 = vrot.lane.b32.xlu0 %v424, 120
        %v483 = vpop.permute.xlu0 %482
        %v485 = vsel %vm434, %v424, 0
        %v488 = vsel %vm434, %v483, 0
        %490 = vmatprep.subr.bf16.mxu0 0
        %491 = vmatpush1.bf16.xpose.msra.mxu0 %v488
        %492 = vmatprep.subr.bf16.mxu0 0
        %493 = vmatpush1.bf16.xpose.msra.mxu0 0
        %494 = vmatprep.subr.bf16.mxu0 0
        %495 = vmatpush1.bf16.xpose.msra.mxu0 0
        %496 = vmatprep.subr.bf16.mxu0 0
        %497 = vmatpush1.bf16.xpose.msra.mxu0 0
        %498 = vmatprep.subr.bf16.mxu0 0
        %499 = vmatpush1.bf16.xpose.msra.mxu0 0
        %500 = vmatprep.subr.bf16.mxu0 0
        %501 = vmatpush1.bf16.xpose.msra.mxu0 0
        %502 = vmatprep.subr.bf16.mxu0 0
        %503 = vmatpush1.bf16.xpose.msra.mxu0 0
        %504 = vmatprep.subr.bf16.mxu0 0
        %505 = vmatpush1.bf16.xpose.msra.mxu0 0
        %506 = vmatprep.subr.bf16.mxu0 0
        %507 = vmatpush1.bf16.xpose.msra.mxu0 0
        %508 = vmatprep.subr.bf16.mxu0 0
        %509 = vmatpush1.bf16.xpose.msra.mxu0 0
        %510 = vmatprep.subr.bf16.mxu0 0
        %511 = vmatpush1.bf16.xpose.msra.mxu0 0
        %512 = vmatprep.subr.bf16.mxu0 0
        %513 = vmatpush1.bf16.xpose.msra.mxu0 0
        %514 = vmatprep.subr.bf16.mxu0 0
        %515 = vmatpush1.bf16.xpose.msra.mxu0 0
        %516 = vmatprep.subr.bf16.mxu0 0
        %517 = vmatpush1.bf16.xpose.msra.mxu0 0
        %518 = vmatprep.subr.bf16.mxu0 0
        %519 = vmatpush1.bf16.xpose.msra.mxu0 0
        %520 = vmatprep.subr.bf16.mxu0 0
        %521 = vmatpush1.bf16.xpose.msra.mxu0 0
        %522 = vmatprep.mubr.bf16.mxu0 0
        %523 = vmatmul.mubr.bf16.gmra.mrb[0].mxu0 %v485
        %v524 = vpop.f32.mrb[0].mxu0
        %v525 = vadd.f32 %v428, %v524
        %v526 = vpop.f32.mrb[0].mxu0
        %v527 = vpop.f32.mrb[0].mxu0
        %v528 = vpop.f32.mrb[0].mxu0
        %529 = vdwg.mxu0
        %531 = vrot.lane.b32.xlu0 %v425, 120
        %v532 = vpop.permute.xlu0 %531
        %v534 = vsel %vm434, %v425, 0
        %v537 = vsel %vm434, %v532, 0
        %539 = vmatprep.subr.bf16.mxu0 0
        %540 = vmatpush1.bf16.xpose.msra.mxu0 %v537
        %541 = vmatprep.subr.bf16.mxu0 0
        %542 = vmatpush1.bf16.xpose.msra.mxu0 0
        %543 = vmatprep.subr.bf16.mxu0 0
        %544 = vmatpush1.bf16.xpose.msra.mxu0 0
        %545 = vmatprep.subr.bf16.mxu0 0
        %546 = vmatpush1.bf16.xpose.msra.mxu0 0
        %547 = vmatprep.subr.bf16.mxu0 0
        %548 = vmatpush1.bf16.xpose.msra.mxu0 0
        %549 = vmatprep.subr.bf16.mxu0 0
        %550 = vmatpush1.bf16.xpose.msra.mxu0 0
        %551 = vmatprep.subr.bf16.mxu0 0
        %552 = vmatpush1.bf16.xpose.msra.mxu0 0
        %553 = vmatprep.subr.bf16.mxu0 0
        %554 = vmatpush1.bf16.xpose.msra.mxu0 0
        %555 = vmatprep.subr.bf16.mxu0 0
        %556 = vmatpush1.bf16.xpose.msra.mxu0 0
        %557 = vmatprep.subr.bf16.mxu0 0
        %558 = vmatpush1.bf16.xpose.msra.mxu0 0
        %559 = vmatprep.subr.bf16.mxu0 0
        %560 = vmatpush1.bf16.xpose.msra.mxu0 0
        %561 = vmatprep.subr.bf16.mxu0 0
        %562 = vmatpush1.bf16.xpose.msra.mxu0 0
        %563 = vmatprep.subr.bf16.mxu0 0
        %564 = vmatpush1.bf16.xpose.msra.mxu0 0
        %565 = vmatprep.subr.bf16.mxu0 0
        %566 = vmatpush1.bf16.xpose.msra.mxu0 0
        %567 = vmatprep.subr.bf16.mxu0 0
        %568 = vmatpush1.bf16.xpose.msra.mxu0 0
        %569 = vmatprep.subr.bf16.mxu0 0
        %570 = vmatpush1.bf16.xpose.msra.mxu0 0
        %571 = vmatprep.mubr.bf16.mxu0 0
        %572 = vmatmul.mubr.bf16.gmra.mrb[0].mxu0 %v534
        %v573 = vpop.f32.mrb[0].mxu0
        %v574 = vadd.f32 %v429, %v573
        %v575 = vpop.f32.mrb[0].mxu0
        %v576 = vpop.f32.mrb[0].mxu0
        %v577 = vpop.f32.mrb[0].mxu0
        %578 = vdwg.mxu0
        %580 = vrot.lane.b32.xlu0 %v426, 120
        %v581 = vpop.permute.xlu0 %580
        %v583 = vsel %vm434, %v426, 0
        %v586 = vsel %vm434, %v581, 0
        %588 = vmatprep.subr.bf16.mxu0 0
        %589 = vmatpush1.bf16.xpose.msra.mxu0 %v586
        %590 = vmatprep.subr.bf16.mxu0 0
        %591 = vmatpush1.bf16.xpose.msra.mxu0 0
        %592 = vmatprep.subr.bf16.mxu0 0
        %593 = vmatpush1.bf16.xpose.msra.mxu0 0
        %594 = vmatprep.subr.bf16.mxu0 0
        %595 = vmatpush1.bf16.xpose.msra.mxu0 0
        %596 = vmatprep.subr.bf16.mxu0 0
        %597 = vmatpush1.bf16.xpose.msra.mxu0 0
        %598 = vmatprep.subr.bf16.mxu0 0
        %599 = vmatpush1.bf16.xpose.msra.mxu0 0
        %600 = vmatprep.subr.bf16.mxu0 0
        %601 = vmatpush1.bf16.xpose.msra.mxu0 0
        %602 = vmatprep.subr.bf16.mxu0 0
        %603 = vmatpush1.bf16.xpose.msra.mxu0 0
        %604 = vmatprep.subr.bf16.mxu0 0
        %605 = vmatpush1.bf16.xpose.msra.mxu0 0
        %606 = vmatprep.subr.bf16.mxu0 0
        %607 = vmatpush1.bf16.xpose.msra.mxu0 0
        %608 = vmatprep.subr.bf16.mxu0 0
        %609 = vmatpush1.bf16.xpose.msra.mxu0 0
        %610 = vmatprep.subr.bf16.mxu0 0
        %611 = vmatpush1.bf16.xpose.msra.mxu0 0
        %612 = vmatprep.subr.bf16.mxu0 0
        %613 = vmatpush1.bf16.xpose.msra.mxu0 0
        %614 = vmatprep.subr.bf16.mxu0 0
        %615 = vmatpush1.bf16.xpose.msra.mxu0 0
        %616 = vmatprep.subr.bf16.mxu0 0
        %617 = vmatpush1.bf16.xpose.msra.mxu0 0
        %618 = vmatprep.subr.bf16.mxu0 0
        %619 = vmatpush1.bf16.xpose.msra.mxu0 0
        %620 = vmatprep.mubr.bf16.mxu0 0
        %621 = vmatmul.mubr.bf16.gmra.mrb[0].mxu0 %v583
        %v622 = vpop.f32.mrb[0].mxu0
        %v623 = vadd.f32 %v430, %v622
        %v624 = vpop.f32.mrb[0].mxu0
        %v625 = vpop.f32.mrb[0].mxu0
        %v626 = vpop.f32.mrb[0].mxu0
        %627 = vdwg.mxu0
        %v628 = vsel %vm434, %v476, -inf
        %629 = vmax.xlane.f32.xlu0 %v628
        %v630 = vpop.xlane.xlu0 %629
        %v631 = vsel %vm434, %v525, -inf
        %632 = vmax.xlane.f32.xlu0 %v631
        %v633 = vpop.xlane.xlu0 %632
        %v634 = vsel %vm434, %v574, -inf
        %635 = vmax.xlane.f32.xlu0 %v634
        %v636 = vpop.xlane.xlu0 %635
        %v637 = vsel %vm434, %v623, -inf
        %638 = vmax.xlane.f32.xlu0 %v637
        %v639 = vpop.xlane.xlu0 %638
        %v640 = vsub.f32 %v476, %v630
        %v641 = vsub.f32 %v525, %v633
        %v642 = vsub.f32 %v574, %v636
        %v643 = vsub.f32 %v623, %v639
        %v644 = vmul.f32 %v640, 1.442695
        %v645 = vpow.pop %v644
        %v646 = vmul.f32 %v641, 1.442695
        %v647 = vpow.pop %v646
        %v648 = vmul.f32 %v642, 1.442695
        %v649 = vpow.pop %v648
        %v650 = vmul.f32 %v643, 1.442695
        %v651 = vpow.pop %v650
        %v652 = vsel %vm434, %v645, 0.0
        %653 = vadd.xlane.f32.xlu0 %v652
        %v654 = vpop.xlane.xlu0 %653
        %v655 = vsel %vm434, %v647, 0.0
        %656 = vadd.xlane.f32.xlu0 %v655
        %v657 = vpop.xlane.xlu0 %656
        %v658 = vsel %vm434, %v649, 0.0
        %659 = vadd.xlane.f32.xlu0 %v658
        %v660 = vpop.xlane.xlu0 %659
        %v661 = vsel %vm434, %v651, 0.0
        %662 = vadd.xlane.f32.xlu0 %v661
        %v663 = vpop.xlane.xlu0 %662
        %v664 = vrcp.pop %v654
        %v665 = vrcp.pop %v657
        %v666 = vrcp.pop %v660
        %v667 = vrcp.pop %v663
        %v668 = vmul.f32 %v645, %v664
        %v669 = vmul.f32 %v647, %v665
        %v670 = vmul.f32 %v649, %v666
        %v671 = vmul.f32 %v651, %v667
        %v672 = vpack.c.bf16 %v668, %v668
        %v673 = vpack.c.bf16 %v669, %v669
        %v674 = vpack.c.bf16 %v670, %v670
        %v675 = vpack.c.bf16 %v671, %v671
        %676 = vrot.lane.b32.xlu0 %v423, 112
        %v677 = vpop.permute.xlu0 %676
        %v679 = vsel %vm434, %v672, 0
        %vm681 = vcmask 1043456
        %v683 = vsel %vm681, %v677, 0
        %685 = vmatprep.subr.bf16.mxu0 0
        %686 = vmatpush1.bf16.msra.mxu0 %v683
        %687 = vmatprep.subr.bf16.mxu0 0
        %688 = vmatpush1.bf16.msra.mxu0 0
        %689 = vmatprep.subr.bf16.mxu0 0
        %690 = vmatpush1.bf16.msra.mxu0 0
        %691 = vmatprep.subr.bf16.mxu0 0
        %692 = vmatpush1.bf16.msra.mxu0 0
        %693 = vmatprep.subr.bf16.mxu0 0
        %694 = vmatpush1.bf16.msra.mxu0 0
        %695 = vmatprep.subr.bf16.mxu0 0
        %696 = vmatpush1.bf16.msra.mxu0 0
        %697 = vmatprep.subr.bf16.mxu0 0
        %698 = vmatpush1.bf16.msra.mxu0 0
        %699 = vmatprep.subr.bf16.mxu0 0
        %700 = vmatpush1.bf16.msra.mxu0 0
        %701 = vmatprep.subr.bf16.mxu0 0
        %702 = vmatpush1.bf16.msra.mxu0 0
        %703 = vmatprep.subr.bf16.mxu0 0
        %704 = vmatpush1.bf16.msra.mxu0 0
        %705 = vmatprep.subr.bf16.mxu0 0
        %706 = vmatpush1.bf16.msra.mxu0 0
        %707 = vmatprep.subr.bf16.mxu0 0
        %708 = vmatpush1.bf16.msra.mxu0 0
        %709 = vmatprep.subr.bf16.mxu0 0
        %710 = vmatpush1.bf16.msra.mxu0 0
        %711 = vmatprep.subr.bf16.mxu0 0
        %712 = vmatpush1.bf16.msra.mxu0 0
        %713 = vmatprep.subr.bf16.mxu0 0
        %714 = vmatpush1.bf16.msra.mxu0 0
        %715 = vmatprep.subr.bf16.mxu0 0
        %716 = vmatpush1.bf16.msra.mxu0 0
        %717 = vmatprep.mubr.bf16.mxu0 0
        %718 = vmatmul.mubr.bf16.gmra.mrb[0].mxu0 %v679
        %v719 = vpop.f32.mrb[0].mxu0
        %v720 = vadd.f32 0.0, %v719
        %v721 = vpop.f32.mrb[0].mxu0
        %v722 = vpop.f32.mrb[0].mxu0
        %v723 = vpop.f32.mrb[0].mxu0
        %724 = vdwg.mxu0
        %725 = vrot.lane.b32.xlu0 %v424, 112
        %v726 = vpop.permute.xlu0 %725
        %v728 = vsel %vm434, %v673, 0
        %v731 = vsel %vm681, %v726, 0
        %733 = vmatprep.subr.bf16.mxu0 0
        %734 = vmatpush1.bf16.msra.mxu0 %v731
        %735 = vmatprep.subr.bf16.mxu0 0
        %736 = vmatpush1.bf16.msra.mxu0 0
        %737 = vmatprep.subr.bf16.mxu0 0
        %738 = vmatpush1.bf16.msra.mxu0 0
        %739 = vmatprep.subr.bf16.mxu0 0
        %740 = vmatpush1.bf16.msra.mxu0 0
        %741 = vmatprep.subr.bf16.mxu0 0
        %742 = vmatpush1.bf16.msra.mxu0 0
        %743 = vmatprep.subr.bf16.mxu0 0
        %744 = vmatpush1.bf16.msra.mxu0 0
        %745 = vmatprep.subr.bf16.mxu0 0
        %746 = vmatpush1.bf16.msra.mxu0 0
        %747 = vmatprep.subr.bf16.mxu0 0
        %748 = vmatpush1.bf16.msra.mxu0 0
        %749 = vmatprep.subr.bf16.mxu0 0
        %750 = vmatpush1.bf16.msra.mxu0 0
        %751 = vmatprep.subr.bf16.mxu0 0
        %752 = vmatpush1.bf16.msra.mxu0 0
        %753 = vmatprep.subr.bf16.mxu0 0
        %754 = vmatpush1.bf16.msra.mxu0 0
        %755 = vmatprep.subr.bf16.mxu0 0
        %756 = vmatpush1.bf16.msra.mxu0 0
        %757 = vmatprep.subr.bf16.mxu0 0
        %758 = vmatpush1.bf16.msra.mxu0 0
        %759 = vmatprep.subr.bf16.mxu0 0
        %760 = vmatpush1.bf16.msra.mxu0 0
        %761 = vmatprep.subr.bf16.mxu0 0
        %762 = vmatpush1.bf16.msra.mxu0 0
        %763 = vmatprep.subr.bf16.mxu0 0
        %764 = vmatpush1.bf16.msra.mxu0 0
        %765 = vmatprep.mubr.bf16.mxu0 0
        %766 = vmatmul.mubr.bf16.gmra.mrb[0].mxu0 %v728
        %v767 = vpop.f32.mrb[0].mxu0
        %v768 = vadd.f32 0.0, %v767
        %v769 = vpop.f32.mrb[0].mxu0
        %v770 = vpop.f32.mrb[0].mxu0
        %v771 = vpop.f32.mrb[0].mxu0
        %772 = vdwg.mxu0
        %773 = vrot.lane.b32.xlu0 %v425, 112
        %v774 = vpop.permute.xlu0 %773
        %v776 = vsel %vm434, %v674, 0
        %v779 = vsel %vm681, %v774, 0
        %781 = vmatprep.subr.bf16.mxu0 0
        %782 = vmatpush1.bf16.msra.mxu0 %v779
        %783 = vmatprep.subr.bf16.mxu0 0
        %784 = vmatpush1.bf16.msra.mxu0 0
        %785 = vmatprep.subr.bf16.mxu0 0
        %786 = vmatpush1.bf16.msra.mxu0 0
        %787 = vmatprep.subr.bf16.mxu0 0
        %788 = vmatpush1.bf16.msra.mxu0 0
        %789 = vmatprep.subr.bf16.mxu0 0
        %790 = vmatpush1.bf16.msra.mxu0 0
        %791 = vmatprep.subr.bf16.mxu0 0
        %792 = vmatpush1.bf16.msra.mxu0 0
        %793 = vmatprep.subr.bf16.mxu0 0
        %794 = vmatpush1.bf16.msra.mxu0 0
        %795 = vmatprep.subr.bf16.mxu0 0
        %796 = vmatpush1.bf16.msra.mxu0 0
        %797 = vmatprep.subr.bf16.mxu0 0
        %798 = vmatpush1.bf16.msra.mxu0 0
        %799 = vmatprep.subr.bf16.mxu0 0
        %800 = vmatpush1.bf16.msra.mxu0 0
        %801 = vmatprep.subr.bf16.mxu0 0
        %802 = vmatpush1.bf16.msra.mxu0 0
        %803 = vmatprep.subr.bf16.mxu0 0
        %804 = vmatpush1.bf16.msra.mxu0 0
        %805 = vmatprep.subr.bf16.mxu0 0
        %806 = vmatpush1.bf16.msra.mxu0 0
        %807 = vmatprep.subr.bf16.mxu0 0
        %808 = vmatpush1.bf16.msra.mxu0 0
        %809 = vmatprep.subr.bf16.mxu0 0
        %810 = vmatpush1.bf16.msra.mxu0 0
        %811 = vmatprep.subr.bf16.mxu0 0
        %812 = vmatpush1.bf16.msra.mxu0 0
        %813 = vmatprep.mubr.bf16.mxu0 0
        %814 = vmatmul.mubr.bf16.gmra.mrb[0].mxu0 %v776
        %v815 = vpop.f32.mrb[0].mxu0
        %v816 = vadd.f32 0.0, %v815
        %v817 = vpop.f32.mrb[0].mxu0
        %v818 = vpop.f32.mrb[0].mxu0
        %v819 = vpop.f32.mrb[0].mxu0
        %820 = vdwg.mxu0
        %821 = vrot.lane.b32.xlu0 %v426, 112
        %v822 = vpop.permute.xlu0 %821
        %v824 = vsel %vm434, %v675, 0
        %v827 = vsel %vm681, %v822, 0
        %829 = vmatprep.subr.bf16.mxu0 0
        %830 = vmatpush1.bf16.msra.mxu0 %v827
        %831 = vmatprep.subr.bf16.mxu0 0
        %832 = vmatpush1.bf16.msra.mxu0 0
        %833 = vmatprep.subr.bf16.mxu0 0
        %834 = vmatpush1.bf16.msra.mxu0 0
        %835 = vmatprep.subr.bf16.mxu0 0
        %836 = vmatpush1.bf16.msra.mxu0 0
        %837 = vmatprep.subr.bf16.mxu0 0
        %838 = vmatpush1.bf16.msra.mxu0 0
        %839 = vmatprep.subr.bf16.mxu0 0
        %840 = vmatpush1.bf16.msra.mxu0 0
        %841 = vmatprep.subr.bf16.mxu0 0
        %842 = vmatpush1.bf16.msra.mxu0 0
        %843 = vmatprep.subr.bf16.mxu0 0
        %844 = vmatpush1.bf16.msra.mxu0 0
        %845 = vmatprep.subr.bf16.mxu0 0
        %846 = vmatpush1.bf16.msra.mxu0 0
        %847 = vmatprep.subr.bf16.mxu0 0
        %848 = vmatpush1.bf16.msra.mxu0 0
        %849 = vmatprep.subr.bf16.mxu0 0
        %850 = vmatpush1.bf16.msra.mxu0 0
        %851 = vmatprep.subr.bf16.mxu0 0
        %852 = vmatpush1.bf16.msra.mxu0 0
        %853 = vmatprep.subr.bf16.mxu0 0
        %854 = vmatpush1.bf16.msra.mxu0 0
        %855 = vmatprep.subr.bf16.mxu0 0
        %856 = vmatpush1.bf16.msra.mxu0 0
        %857 = vmatprep.subr.bf16.mxu0 0
        %858 = vmatpush1.bf16.msra.mxu0 0
        %859 = vmatprep.subr.bf16.mxu0 0
        %860 = vmatpush1.bf16.msra.mxu0 0
        %861 = vmatprep.mubr.bf16.mxu0 0
        %862 = vmatmul.mubr.bf16.gmra.mrb[0].mxu0 %v824
        %v863 = vpop.f32.mrb[0].mxu0
        %v864 = vadd.f32 0.0, %v863
        %v865 = vpop.f32.mrb[0].mxu0
        %v866 = vpop.f32.mrb[0].mxu0
        %v867 = vpop.f32.mrb[0].mxu0
        %868 = vdwg.mxu0
        %v869 = vpack.c.bf16 %v720, %v720
        %v870 = vpack.c.bf16 %v768, %v768
        %v871 = vpack.c.bf16 %v816, %v816
        %v872 = vpack.c.bf16 %v864, %v864
        %v873 = vld [vmem:[%s2] sm:$0xf]
        %v874 = vld [vmem:[%s2 + $0x4] sm:$0xf]
        %v875 = vld [vmem:[%s2 + $0x8] sm:$0xf]
        %v876 = vld [vmem:[%s2 + $0xc] sm:$0xf]
        %v878 = vsel %vm434, %v869, 0
        %v881 = vsel %vm681, %v873, 0
        %883 = vmatprep.subr.bf16.mxu0 0
        %884 = vmatpush1.bf16.msra.mxu0 %v881
        %885 = vmatprep.subr.bf16.mxu0 0
        %886 = vmatpush1.bf16.msra.mxu0 0
        %887 = vmatprep.subr.bf16.mxu0 0
        %888 = vmatpush1.bf16.msra.mxu0 0
        %889 = vmatprep.subr.bf16.mxu0 0
        %890 = vmatpush1.bf16.msra.mxu0 0
        %891 = vmatprep.subr.bf16.mxu0 0
        %892 = vmatpush1.bf16.msra.mxu0 0
        %893 = vmatprep.subr.bf16.mxu0 0
        %894 = vmatpush1.bf16.msra.mxu0 0
        %895 = vmatprep.subr.bf16.mxu0 0
        %896 = vmatpush1.bf16.msra.mxu0 0
        %897 = vmatprep.subr.bf16.mxu0 0
        %898 = vmatpush1.bf16.msra.mxu0 0
        %899 = vmatprep.subr.bf16.mxu0 0
        %900 = vmatpush1.bf16.msra.mxu0 0
        %901 = vmatprep.subr.bf16.mxu0 0
        %902 = vmatpush1.bf16.msra.mxu0 0
        %903 = vmatprep.subr.bf16.mxu0 0
        %904 = vmatpush1.bf16.msra.mxu0 0
        %905 = vmatprep.subr.bf16.mxu0 0
        %906 = vmatpush1.bf16.msra.mxu0 0
        %907 = vmatprep.subr.bf16.mxu0 0
        %908 = vmatpush1.bf16.msra.mxu0 0
        %909 = vmatprep.subr.bf16.mxu0 0
        %910 = vmatpush1.bf16.msra.mxu0 0
        %911 = vmatprep.subr.bf16.mxu0 0
        %912 = vmatpush1.bf16.msra.mxu0 0
        %913 = vmatprep.subr.bf16.mxu0 0
        %914 = vmatpush1.bf16.msra.mxu0 0
        %915 = vmatprep.mubr.bf16.mxu0 0
        %916 = vmatmul.mubr.bf16.gmra.mrb[0].mxu0 %v878
        %v917 = vpop.f32.mrb[0].mxu0
        %v918 = vadd.f32 0.0, %v917
        %v919 = vpop.f32.mrb[0].mxu0
        %v920 = vpop.f32.mrb[0].mxu0
        %v921 = vpop.f32.mrb[0].mxu0
        %922 = vdwg.mxu0
        %v924 = vsel %vm434, %v870, 0
        %v927 = vsel %vm681, %v874, 0
        %929 = vmatprep.subr.bf16.mxu0 0
        %930 = vmatpush1.bf16.msra.mxu0 %v927
        %931 = vmatprep.subr.bf16.mxu0 0
        %932 = vmatpush1.bf16.msra.mxu0 0
        %933 = vmatprep.subr.bf16.mxu0 0
        %934 = vmatpush1.bf16.msra.mxu0 0
        %935 = vmatprep.subr.bf16.mxu0 0
        %936 = vmatpush1.bf16.msra.mxu0 0
        %937 = vmatprep.subr.bf16.mxu0 0
        %938 = vmatpush1.bf16.msra.mxu0 0
        %939 = vmatprep.subr.bf16.mxu0 0
        %940 = vmatpush1.bf16.msra.mxu0 0
        %941 = vmatprep.subr.bf16.mxu0 0
        %942 = vmatpush1.bf16.msra.mxu0 0
        %943 = vmatprep.subr.bf16.mxu0 0
        %944 = vmatpush1.bf16.msra.mxu0 0
        %945 = vmatprep.subr.bf16.mxu0 0
        %946 = vmatpush1.bf16.msra.mxu0 0
        %947 = vmatprep.subr.bf16.mxu0 0
        %948 = vmatpush1.bf16.msra.mxu0 0
        %949 = vmatprep.subr.bf16.mxu0 0
        %950 = vmatpush1.bf16.msra.mxu0 0
        %951 = vmatprep.subr.bf16.mxu0 0
        %952 = vmatpush1.bf16.msra.mxu0 0
        %953 = vmatprep.subr.bf16.mxu0 0
        %954 = vmatpush1.bf16.msra.mxu0 0
        %955 = vmatprep.subr.bf16.mxu0 0
        %956 = vmatpush1.bf16.msra.mxu0 0
        %957 = vmatprep.subr.bf16.mxu0 0
        %958 = vmatpush1.bf16.msra.mxu0 0
        %959 = vmatprep.subr.bf16.mxu0 0
        %960 = vmatpush1.bf16.msra.mxu0 0
        %961 = vmatprep.mubr.bf16.mxu0 0
        %962 = vmatmul.mubr.bf16.gmra.mrb[0].mxu0 %v924
        %v963 = vpop.f32.mrb[0].mxu0
        %v964 = vadd.f32 0.0, %v963
        %v965 = vpop.f32.mrb[0].mxu0
        %v966 = vpop.f32.mrb[0].mxu0
        %v967 = vpop.f32.mrb[0].mxu0
        %968 = vdwg.mxu0
        %v970 = vsel %vm434, %v871, 0
        %v973 = vsel %vm681, %v875, 0
        %975 = vmatprep.subr.bf16.mxu0 0
        %976 = vmatpush1.bf16.msra.mxu0 %v973
        %977 = vmatprep.subr.bf16.mxu0 0
        %978 = vmatpush1.bf16.msra.mxu0 0
        %979 = vmatprep.subr.bf16.mxu0 0
        %980 = vmatpush1.bf16.msra.mxu0 0
        %981 = vmatprep.subr.bf16.mxu0 0
        %982 = vmatpush1.bf16.msra.mxu0 0
        %983 = vmatprep.subr.bf16.mxu0 0
        %984 = vmatpush1.bf16.msra.mxu0 0
        %985 = vmatprep.subr.bf16.mxu0 0
        %986 = vmatpush1.bf16.msra.mxu0 0
        %987 = vmatprep.subr.bf16.mxu0 0
        %988 = vmatpush1.bf16.msra.mxu0 0
        %989 = vmatprep.subr.bf16.mxu0 0
        %990 = vmatpush1.bf16.msra.mxu0 0
        %991 = vmatprep.subr.bf16.mxu0 0
        %992 = vmatpush1.bf16.msra.mxu0 0
        %993 = vmatprep.subr.bf16.mxu0 0
        %994 = vmatpush1.bf16.msra.mxu0 0
        %995 = vmatprep.subr.bf16.mxu0 0
        %996 = vmatpush1.bf16.msra.mxu0 0
        %997 = vmatprep.subr.bf16.mxu0 0
        %998 = vmatpush1.bf16.msra.mxu0 0
        %999 = vmatprep.subr.bf16.mxu0 0
        %1000 = vmatpush1.bf16.msra.mxu0 0
        %1001 = vmatprep.subr.bf16.mxu0 0
        %1002 = vmatpush1.bf16.msra.mxu0 0
        %1003 = vmatprep.subr.bf16.mxu0 0
        %1004 = vmatpush1.bf16.msra.mxu0 0
        %1005 = vmatprep.subr.bf16.mxu0 0
        %1006 = vmatpush1.bf16.msra.mxu0 0
        %1007 = vmatprep.mubr.bf16.mxu0 0
        %1008 = vmatmul.mubr.bf16.gmra.mrb[0].mxu0 %v970
        %v1009 = vpop.f32.mrb[0].mxu0
        %v1010 = vadd.f32 0.0, %v1009
        %v1011 = vpop.f32.mrb[0].mxu0
        %v1012 = vpop.f32.mrb[0].mxu0
        %v1013 = vpop.f32.mrb[0].mxu0
        %1014 = vdwg.mxu0
        %v1016 = vsel %vm434, %v872, 0
        %v1019 = vsel %vm681, %v876, 0
        %1021 = vmatprep.subr.bf16.mxu0 0
        %1022 = vmatpush1.bf16.msra.mxu0 %v1019
        %1023 = vmatprep.subr.bf16.mxu0 0
        %1024 = vmatpush1.bf16.msra.mxu0 0
        %1025 = vmatprep.subr.bf16.mxu0 0
        %1026 = vmatpush1.bf16.msra.mxu0 0
        %1027 = vmatprep.subr.bf16.mxu0 0
        %1028 = vmatpush1.bf16.msra.mxu0 0
        %1029 = vmatprep.subr.bf16.mxu0 0
        %1030 = vmatpush1.bf16.msra.mxu0 0
        %1031 = vmatprep.subr.bf16.mxu0 0
        %1032 = vmatpush1.bf16.msra.mxu0 0
        %1033 = vmatprep.subr.bf16.mxu0 0
        %1034 = vmatpush1.bf16.msra.mxu0 0
        %1035 = vmatprep.subr.bf16.mxu0 0
        %1036 = vmatpush1.bf16.msra.mxu0 0
        %1037 = vmatprep.subr.bf16.mxu0 0
        %1038 = vmatpush1.bf16.msra.mxu0 0
        %1039 = vmatprep.subr.bf16.mxu0 0
        %1040 = vmatpush1.bf16.msra.mxu0 0
        %1041 = vmatprep.subr.bf16.mxu0 0
        %1042 = vmatpush1.bf16.msra.mxu0 0
        %1043 = vmatprep.subr.bf16.mxu0 0
        %1044 = vmatpush1.bf16.msra.mxu0 0
        %1045 = vmatprep.subr.bf16.mxu0 0
        %1046 = vmatpush1.bf16.msra.mxu0 0
        %1047 = vmatprep.subr.bf16.mxu0 0
        %1048 = vmatpush1.bf16.msra.mxu0 0
        %1049 = vmatprep.subr.bf16.mxu0 0
        %1050 = vmatpush1.bf16.msra.mxu0 0
        %1051 = vmatprep.subr.bf16.mxu0 0
        %1052 = vmatpush1.bf16.msra.mxu0 0
        %1053 = vmatprep.mubr.bf16.mxu0 0
        %1054 = vmatmul.mubr.bf16.gmra.mrb[0].mxu0 %v1016
        %v1055 = vpop.f32.mrb[0].mxu0
        %v1056 = vadd.f32 0.0, %v1055
        %v1057 = vpop.f32.mrb[0].mxu0
        %v1058 = vpop.f32.mrb[0].mxu0
        %v1059 = vpop.f32.mrb[0].mxu0
        %1060 = vdwg.mxu0
        %v1061 = vsel %vm223, %v918, 0.0
        %v1062 = vsel %vm223, %v964, 0.0
        %v1063 = vadd.f32 %v1061, %v1062
        %v1064 = vsel %vm223, %v1010, 0.0
        %v1065 = vadd.f32 %v1063, %v1064
        %v1066 = vsel %vm223, %v1056, 0.0
        %v1067 = vadd.f32 %v1065, %v1066
        %1068 = vst.msk [vmem:[%s188] sm:$0xff] %vm223, %v1067
        %s1069 = sand.u32 %s115, 1
        %s1070 = scalar_lea.sflag [#allocation3], %s1069
        %s1071 = sand.u32 %s115, 1
        %s1072 = smul.addr %s1071, 8
        %s1073 = scalar_lea.vmem [#allocation2], %s1072
        // Predicated region
        $region37: #{tpu_custom_call.1} parent=35 // pred_check
          %p1074 = pneg %p125
        $region38: #{tpu_custom_call.1} parent=35 // pred_check_branch
          %1076 = sbr.rel (%p1074) target = $region40
        $region39: #{tpu_custom_call.1} parent=35 // pred_region
          %s1078 = ssub.s32 128, 128
          %1079 = vsyncadd %s1070, %s1078
          %s1080 = smul.addr %s18, 128
          %s1081 = scalar_lea.hbm %s4, %s1080
          %s1083 = sshll.u32 %s1073, 4
          %s1084 = int_to_ptr.vmem [resolvable:$true] %s1083
          %1086 = dma.vmem_to_hbm [thread:$0]  %s1084, 128, %s1081, %s1070
        $region40: #{tpu_custom_call.1} parent=35 // pred_fallthru
          _
      $region36: #{tpu_custom_call.1} parent=5 // pred_fallthru
        _
      %p1087 = scmp.le.s32.totalorder 2, %s13
      // Predicated region
      $region41: #{tpu_custom_call.1} parent=5 // pred_check
        %p1088 = pneg %p1087
      $region42: #{tpu_custom_call.1} parent=5 // pred_check_branch
        %1090 = sbr.rel (%p1088) target = $region44
      $region43: #{tpu_custom_call.1} parent=5 // pred_region
        %s1091 = ssub.s32 %s13, 2
        // Predicated region
        $region45: #{tpu_custom_call.1} parent=43 // pred_check
          %p1092 = pneg %p131
        $region46: #{tpu_custom_call.1} parent=43 // pred_check_branch
          %1094 = sbr.rel (%p1092) target = $region48
        $region47: #{tpu_custom_call.1} parent=43 // pred_region
          %s1095 = sand.u32 %s116, 1
          %s1096 = scalar_lea.sflag [#allocation3], %s1095
          %s1097 = sand.u32 %s116, 1
          %s1098 = smul.addr %s1097, 8
          %s1099 = scalar_lea.vmem [#allocation2], %s1098
          %1100 = dma.done %s1096, 128
        $region48: #{tpu_custom_call.1} parent=43 // pred_fallthru
          _
      $region44: #{tpu_custom_call.1} parent=5 // pred_fallthru
        _
    $region6: #{tpu_custom_call.1} parent=1 // loop_footer
      %s17 = sadd.s32 1, %s13
    $region7: #{tpu_custom_call.1} parent=1 // loop_footer_branch
      %12 = sbr.rel target = $region3
    $region8: #{tpu_custom_call.1} parent=1 // loop_exit
      _
    %1101 = vsyncpa [#allocation3], 1
    %s1102 = scalar_lea.sflag [#allocation3], 1
    %1103 = vsyncpa %s1102, 1

</llo_original>
